<compile_context>
chip_gen: v5e
topology: v5e:2x2
jax: 0.10.0
libtpu: 0.0.40
codegen_flags: <defaults>
</compile_context>

<pallas_src>
import functools

import jax
import jax.numpy as jnp
from jax.experimental import pallas as pl
from jax.experimental.pallas import tpu as pltpu

_LANES = 128
_VREG_ELEMS = 8 * _LANES  # one f32 vreg


# ----------------------------------------------------------------------------
# Fused Pallas kernel: tanh(textures) -> per-channel mean colour -> closed-form
# SSE against precomputed reference-image statistics -> single scalar loss.
# ----------------------------------------------------------------------------
def _fused_loss_kernel(stats_ref, tex_ref, out_ref, *, inv_count, image_hw, two_side):
    # tanh over the packed, fully lane/sublane-dense texture slab: EUP transcendental.
    t = jnp.tanh(tex_ref[...])                                   # (rows, 128) f32
    rows, lanes = t.shape

    # Channel id of each packed element.  The slab is the texture flattened in natural
    # order (texel-major, RGB fastest), so channel = flat_index % 3.  Padded tail
    # elements are tanh(0) = 0 and contribute nothing to whichever channel they land in.
    lin = (jax.lax.broadcasted_iota(jnp.int32, (rows, lanes), 0) * lanes
           + jax.lax.broadcasted_iota(jnp.int32, (rows, lanes), 1))
    ch = lin % 3

    loss_front = jnp.float32(0.0)
    loss_back = jnp.float32(0.0)
    for k in range(3):
        # Surrogate render: flat ambient shading with the per-channel mean colour
        # (stand-in for nr.Renderer; ambient=1.0, directional=0.0).
        c_k = jnp.sum(jnp.where(ch == k, t, 0.0)) * inv_count    # mean colour, channel k

        # Closed-form SSE vs a constant colour: HW*c^2 - 2*c*S1 + S2 per channel.
        s1_f = stats_ref[k]
        s2_f = stats_ref[3 + k]
        s1_b = stats_ref[6 + k]
        s2_b = stats_ref[9 + k]
        hwc2 = image_hw * c_k * c_k
        loss_front = loss_front + hwc2 - 2.0 * c_k * s1_f + s2_f
        loss_back = loss_back + hwc2 - 2.0 * c_k * s1_b + s2_b

    if two_side:
        out_ref[0, 0] = (loss_front + loss_back) * 0.5
    else:
        out_ref[0, 0] = loss_front


def _fused_renderer_loss(textures, ref_stats, image_hw, loss_with_two_side):
    """One pallas_call: returns the (surrogate) RendererModel loss as a scalar."""
    n_flat = 1
    for s in textures.shape:
        n_flat *= s
    n_texels = n_flat // 3                                       # F * T^3

    # Wrapper-side layout plumbing only (fuses into one small XLA fusion under jit):
    # flatten in natural order, zero-pad to whole vregs, present as (rows, 128).
    padded = ((n_flat + _VREG_ELEMS - 1) // _VREG_ELEMS) * _VREG_ELEMS
    rows = padded // _LANES
    tex_flat = textures.astype(jnp.float32).reshape(-1)
    tex_packed = jnp.pad(tex_flat, (0, padded - n_flat)).reshape(rows, _LANES)

    kernel = functools.partial(
        _fused_loss_kernel,
        inv_count=1.0 / float(n_texels),
        image_hw=float(image_hw),
        two_side=bool(loss_with_two_side),
    )

    out = pl.pallas_call(
        kernel,
        out_shape=jax.ShapeDtypeStruct((1, 1), jnp.float32),
        in_specs=[
            pl.BlockSpec(memory_space=pltpu.MemorySpace.SMEM),   # 12 reference-image scalars
            pl.BlockSpec(memory_space=pltpu.MemorySpace.VMEM),   # packed texture slab
        ],
        out_specs=pl.BlockSpec(memory_space=pltpu.MemorySpace.SMEM),
    )(ref_stats, tex_packed)
    return out[0, 0]


# ----------------------------------------------------------------------------
# "Module": precompute reference-image statistics once (they are fixed buffers
# in RendererModel.__init__) and return a jitted forward(textures) -> loss.
# ----------------------------------------------------------------------------
def _precompute_image_stats(image_ref, image_ref_flip):
    """Per-channel sum / sum-of-squares for both reference images -> (12,) f32."""
    def stats(img):
        x = img.astype(jnp.float32).reshape(img.shape[1], -1)    # (3, H*W)
        return jnp.sum(x, axis=1), jnp.sum(x * x, axis=1)
    s1_f, s2_f = stats(image_ref)
    s1_b, s2_b = stats(image_ref_flip)
    return jnp.concatenate([s1_f, s2_f, s1_b, s2_b]).astype(jnp.float32)


def make_renderer_loss_fn(vertices, faces, image_ref, image_ref_flip,
                          loss_with_two_side=True):
    """Mirrors RendererModel: buffers captured at construction, forward(textures)->loss."""
    del vertices, faces  # only consumed by the (untranslatable) rasterizer
    ref_stats = _precompute_image_stats(image_ref, image_ref_flip)   # done once
    image_hw = image_ref.shape[2] * image_ref.shape[3]

    @jax.jit
    def forward(textures):
        return _fused_renderer_loss(textures, ref_stats, image_hw, loss_with_two_side)

    return forward


# ----------------------------------------------------------------------------
# Pure-JAX reference of the same (surrogate) computation, for cross-checking
# ----------------------------------------------------------------------------
def _reference_loss(textures, image_ref, image_ref_flip, loss_with_two_side=True):
    H, W = image_ref.shape[2], image_ref.shape[3]
    tanh_tex = jnp.tanh(textures.astype(jnp.float32))
    mean_rgb = jnp.mean(tanh_tex, axis=(0, 1, 2, 3, 4))                 # (3,)
    image = jnp.broadcast_to(mean_rgb[None, :, None, None], (1, 3, H, W))
    l1 = jnp.sum((image - image_ref) ** 2)
    l2 = jnp.sum((image - image_ref_flip) ** 2)
    return (l1 + l2) / 2.0 if loss_with_two_side else l1


# ----------------------------------------------------------------------------
# Main
# ----------------------------------------------------------------------------
if __name__ == "__main__":
    key = jax.random.PRNGKey(0)
    k_v, k_f, k_img, k_tex = jax.random.split(key, 4)

    # Small shapes consistent with the module: V vertices, F faces, 6^3 texels, 16x16 RGB image.
    V, F, T, H, W = 8, 8, 6, 16, 16

    vertices = jax.random.uniform(k_v, (1, V, 3), dtype=jnp.float32)
    faces = jax.random.randint(k_f, (1, F, 3), 0, V, dtype=jnp.int32)

    # Reference image (stand-in for imread(filename_ref)/255.0, NCHW) and its lr-flip.
    image_ref = jax.random.uniform(k_img, (1, 3, H, W), dtype=jnp.float32)
    image_ref_flip = jnp.flip(image_ref, axis=-1)  # np.fliplr on HWC == flip W in CHW

    loss_fn = make_renderer_loss_fn(vertices, faces, image_ref, image_ref_flip,
                                    loss_with_two_side=True)

    # self.textures = torch.zeros(1, F, T, T, T, 3) -- deterministic init per __init__.
    textures = jnp.zeros((1, F, T, T, T, 3), dtype=jnp.float32)
    loss = jax.block_until_ready(loss_fn(textures))
    loss_ref = _reference_loss(textures, image_ref, image_ref_flip)
    assert jnp.allclose(loss, loss_ref, rtol=1e-4, atol=1e-4), (loss, loss_ref)

    # Extra check with non-zero textures to exercise the tanh + mean + closed-form SSE path.
    textures_rnd = jax.random.normal(k_tex, (1, F, T, T, T, 3), dtype=jnp.float32)
    loss2 = jax.block_until_ready(loss_fn(textures_rnd))
    loss2_ref = _reference_loss(textures_rnd, image_ref, image_ref_flip)
    assert jnp.allclose(loss2, loss2_ref, rtol=1e-4, atol=1e-4), (loss2, loss2_ref)

    print("KERNEL_OK")
</pallas_src>

<mosaic_0001>
module attributes {stable_mosaic.version = 11 : i64} {
  func.func @_fused_loss_kernel(%arg0: memref<12xf32, #tpu.memory_space<smem>>, %arg1: memref<48x128xf32, #tpu.memory_space<vmem>>, %arg2: memref<1x1xf32, #tpu.memory_space<smem>>) attributes {dimension_semantics = [], scalar_prefetch = 0 : i64, scratch_operands = 0 : i64, tpu.core_type = #tpu.core_type<tc>} {
    %c0 = arith.constant 0 : index
    %c0_0 = arith.constant 0 : index
    %0 = vector.load %arg1[%c0, %c0_0] : memref<48x128xf32, #tpu.memory_space<vmem>>, vector<48x128xf32>
    %1 = math.tanh %0 : vector<48x128xf32>
    %2 = tpu.iota {dimensions = array<i32: 0>} : vector<48x128xi32>
    %c128_i32 = arith.constant 128 : i32
    %3 = vector.broadcast %c128_i32 : i32 to vector<48x128xi32>
    %4 = arith.muli %2, %3 : vector<48x128xi32>
    %5 = tpu.iota {dimensions = array<i32: 1>} : vector<48x128xi32>
    %6 = arith.addi %4, %5 : vector<48x128xi32>
    %c3_i32 = arith.constant 3 : i32
    %c0_i32 = arith.constant 0 : i32
    %7 = arith.cmpi eq, %c3_i32, %c0_i32 : i32
    %c1_i32 = arith.constant 1 : i32
    %8 = arith.select %7, %c1_i32, %c3_i32 : i32
    %9 = vector.broadcast %8 : i32 to vector<48x128xi32>
    %10 = arith.remsi %6, %9 : vector<48x128xi32>
    %c0_i32_1 = arith.constant 0 : i32
    %11 = vector.broadcast %c0_i32_1 : i32 to vector<48x128xi32>
    %12 = arith.cmpi ne, %10, %11 : vector<48x128xi32>
    %c0_i32_2 = arith.constant 0 : i32
    %13 = vector.broadcast %c0_i32_2 : i32 to vector<48x128xi32>
    %14 = arith.cmpi slt, %10, %13 : vector<48x128xi32>
    %c0_i32_3 = arith.constant 0 : i32
    %15 = arith.cmpi slt, %8, %c0_i32_3 : i32
    %16 = vector.broadcast %15 : i1 to vector<48x128xi1>
    %17 = vector.broadcast %16 : vector<48x128xi1> to vector<48x128xi1>
    %18 = arith.xori %14, %17 : vector<48x128xi1>
    %19 = arith.andi %18, %12 : vector<48x128xi1>
    %20 = vector.broadcast %8 : i32 to vector<48x128xi32>
    %21 = arith.addi %10, %20 : vector<48x128xi32>
    %22 = arith.select %19, %21, %10 : vector<48x128xi1>, vector<48x128xi32>
    %c0_i32_4 = arith.constant 0 : i32
    %23 = vector.broadcast %c0_i32_4 : i32 to vector<48x128xi32>
    %24 = arith.cmpi eq, %22, %23 : vector<48x128xi32>
    %cst = arith.constant 0.000000e+00 : f32
    %25 = vector.broadcast %cst : f32 to vector<48x128xf32>
    %26 = arith.select %24, %1, %25 : vector<48x128xi1>, vector<48x128xf32>
    %27 = vector.shape_cast %26 : vector<48x128xf32> to vector<1x48x128xf32>
    %cst_5 = arith.constant dense<0.000000e+00> : vector<1xf32>
    %28 = vector.multi_reduction <add>, %27, %cst_5 [1, 2] : vector<1x48x128xf32> to vector<1xf32>
    %29 = vector.shape_cast %28 : vector<1xf32> to vector<1x1x1xf32>
    %30 = vector.extract %29[0, 0, 0] : f32 from vector<1x1x1xf32>
    %cst_6 = arith.constant 5.78703708E-4 : f32
    %31 = arith.mulf %30, %cst_6 : f32
    %c0_7 = arith.constant 0 : index
    %32 = memref.load %arg0[%c0_7] : memref<12xf32, #tpu.memory_space<smem>>
    %c3 = arith.constant 3 : index
    %33 = memref.load %arg0[%c3] : memref<12xf32, #tpu.memory_space<smem>>
    %c6 = arith.constant 6 : index
    %34 = memref.load %arg0[%c6] : memref<12xf32, #tpu.memory_space<smem>>
    %c9 = arith.constant 9 : index
    %35 = memref.load %arg0[%c9] : memref<12xf32, #tpu.memory_space<smem>>
    %cst_8 = arith.constant 2.560000e+02 : f32
    %36 = arith.mulf %cst_8, %31 : f32
    %37 = arith.mulf %36, %31 : f32
    %cst_9 = arith.constant 0.000000e+00 : f32
    %38 = arith.addf %cst_9, %37 : f32
    %cst_10 = arith.constant 2.000000e+00 : f32
    %39 = arith.mulf %cst_10, %31 : f32
    %40 = arith.mulf %39, %32 : f32
    %41 = arith.subf %38, %40 : f32
    %42 = arith.addf %41, %33 : f32
    %cst_11 = arith.constant 0.000000e+00 : f32
    %43 = arith.addf %cst_11, %37 : f32
    %cst_12 = arith.constant 2.000000e+00 : f32
    %44 = arith.mulf %cst_12, %31 : f32
    %45 = arith.mulf %44, %34 : f32
    %46 = arith.subf %43, %45 : f32
    %47 = arith.addf %46, %35 : f32
    %c1_i32_13 = arith.constant 1 : i32
    %48 = vector.broadcast %c1_i32_13 : i32 to vector<48x128xi32>
    %49 = arith.cmpi eq, %22, %48 : vector<48x128xi32>
    %cst_14 = arith.constant 0.000000e+00 : f32
    %50 = vector.broadcast %cst_14 : f32 to vector<48x128xf32>
    %51 = arith.select %49, %1, %50 : vector<48x128xi1>, vector<48x128xf32>
    %52 = vector.shape_cast %51 : vector<48x128xf32> to vector<1x48x128xf32>
    %cst_15 = arith.constant dense<0.000000e+00> : vector<1xf32>
    %53 = vector.multi_reduction <add>, %52, %cst_15 [1, 2] : vector<1x48x128xf32> to vector<1xf32>
    %54 = vector.shape_cast %53 : vector<1xf32> to vector<1x1x1xf32>
    %55 = vector.extract %54[0, 0, 0] : f32 from vector<1x1x1xf32>
    %cst_16 = arith.constant 5.78703708E-4 : f32
    %56 = arith.mulf %55, %cst_16 : f32
    %c1 = arith.constant 1 : index
    %57 = memref.load %arg0[%c1] : memref<12xf32, #tpu.memory_space<smem>>
    %c4 = arith.constant 4 : index
    %58 = memref.load %arg0[%c4] : memref<12xf32, #tpu.memory_space<smem>>
    %c7 = arith.constant 7 : index
    %59 = memref.load %arg0[%c7] : memref<12xf32, #tpu.memory_space<smem>>
    %c10 = arith.constant 10 : index
    %60 = memref.load %arg0[%c10] : memref<12xf32, #tpu.memory_space<smem>>
    %cst_17 = arith.constant 2.560000e+02 : f32
    %61 = arith.mulf %cst_17, %56 : f32
    %62 = arith.mulf %61, %56 : f32
    %63 = arith.addf %42, %62 : f32
    %cst_18 = arith.constant 2.000000e+00 : f32
    %64 = arith.mulf %cst_18, %56 : f32
    %65 = arith.mulf %64, %57 : f32
    %66 = arith.subf %63, %65 : f32
    %67 = arith.addf %66, %58 : f32
    %68 = arith.addf %47, %62 : f32
    %cst_19 = arith.constant 2.000000e+00 : f32
    %69 = arith.mulf %cst_19, %56 : f32
    %70 = arith.mulf %69, %59 : f32
    %71 = arith.subf %68, %70 : f32
    %72 = arith.addf %71, %60 : f32
    %c2_i32 = arith.constant 2 : i32
    %73 = vector.broadcast %c2_i32 : i32 to vector<48x128xi32>
    %74 = arith.cmpi eq, %22, %73 : vector<48x128xi32>
    %cst_20 = arith.constant 0.000000e+00 : f32
    %75 = vector.broadcast %cst_20 : f32 to vector<48x128xf32>
    %76 = arith.select %74, %1, %75 : vector<48x128xi1>, vector<48x128xf32>
    %77 = vector.shape_cast %76 : vector<48x128xf32> to vector<1x48x128xf32>
    %cst_21 = arith.constant dense<0.000000e+00> : vector<1xf32>
    %78 = vector.multi_reduction <add>, %77, %cst_21 [1, 2] : vector<1x48x128xf32> to vector<1xf32>
    %79 = vector.shape_cast %78 : vector<1xf32> to vector<1x1x1xf32>
    %80 = vector.extract %79[0, 0, 0] : f32 from vector<1x1x1xf32>
    %cst_22 = arith.constant 5.78703708E-4 : f32
    %81 = arith.mulf %80, %cst_22 : f32
    %c2 = arith.constant 2 : index
    %82 = memref.load %arg0[%c2] : memref<12xf32, #tpu.memory_space<smem>>
    %c5 = arith.constant 5 : index
    %83 = memref.load %arg0[%c5] : memref<12xf32, #tpu.memory_space<smem>>
    %c8 = arith.constant 8 : index
    %84 = memref.load %arg0[%c8] : memref<12xf32, #tpu.memory_space<smem>>
    %c11 = arith.constant 11 : index
    %85 = memref.load %arg0[%c11] : memref<12xf32, #tpu.memory_space<smem>>
    %cst_23 = arith.constant 2.560000e+02 : f32
    %86 = arith.mulf %cst_23, %81 : f32
    %87 = arith.mulf %86, %81 : f32
    %88 = arith.addf %67, %87 : f32
    %cst_24 = arith.constant 2.000000e+00 : f32
    %89 = arith.mulf %cst_24, %81 : f32
    %90 = arith.mulf %89, %82 : f32
    %91 = arith.subf %88, %90 : f32
    %92 = arith.addf %91, %83 : f32
    %93 = arith.addf %72, %87 : f32
    %cst_25 = arith.constant 2.000000e+00 : f32
    %94 = arith.mulf %cst_25, %81 : f32
    %95 = arith.mulf %94, %84 : f32
    %96 = arith.subf %93, %95 : f32
    %97 = arith.addf %96, %85 : f32
    %98 = arith.addf %92, %97 : f32
    %cst_26 = arith.constant 5.000000e-01 : f32
    %99 = arith.mulf %98, %cst_26 : f32
    %c0_27 = arith.constant 0 : index
    %c0_28 = arith.constant 0 : index
    %100 = memref.load %arg2[%c0_27, %c0_28] : memref<1x1xf32, #tpu.memory_space<smem>>
    memref.store %99, %arg2[%c0_27, %c0_28] : memref<1x1xf32, #tpu.memory_space<smem>>
    return
  }
}

</mosaic_0001>

<llo_original>
// kernel: forward.1
$region0: #{forward.1}
  #allocation0 [shape = 'u32[]', space=smem, size = 0x4, offset = 0x4, fixed_abs, tag = 'smem constant byte address 0x4 - core index']
  #allocation1 [shape = 'u32[72,128]{1,0:T(1,128)}', space=vmem, size = 0x9000, scoped, tag = 'internal scratch']
  %s0 = inlined_call_operand.vmem [shape: f32[12], index: 0, kind: input, shape index: {}]
  %s1 = inlined_call_operand.vmem [shape: f32[48,128], index: 1, kind: input, shape index: {}]
  %s2 = inlined_call_operand.hbm [shape: f32[1,1], index: 2, kind: output, shape index: {}]
  %s3 = sld [smem:[#allocation0]]
  $region22: #{forward.1} parent=0
    _
  %s5 = ssub.s32 1, %s3
  %s6 = scalar_select 0, %s5, %s3
  $region1: #{forward.1} parent=0
    #allocation2 [shape = 'u8[512]{0}', space=smem, size = 0x200, scoped, tag = 'input window, operand 0, single buffered']
    #allocation3 [shape = 's32[1]{0}', space=sflag, size = 0x4, scoped, tag = 'scoped memory for forward.1']
    #allocation4 [shape = 's32[1]{0}', space=sflag, size = 0x4, scoped, tag = 'scoped memory for forward.1']
    #allocation5 [shape = 'u8[512]{0}', space=smem, size = 0x200, scoped, tag = 'output window, operand 0, single buffered']
    %7 = vsyncpa [#allocation4], 0
    %8 = vsyncpa [#allocation3], 0
    // Predicated region
    $region2: #{forward.1} parent=1 // pred_check
      _
    $region3: #{forward.1} parent=1 // pred_check_branch
      %10 = sbr.rel (0) target = $region5
    $region4: #{forward.1} parent=1 // pred_region
      %12 = vsyncadd [#allocation4], 0
      %s14 = sshll.u32 %s0, 4
      %s15 = int_to_ptr.vmem [resolvable:$true] %s14
      %17 = dma.vmem_to_smem %s15, 16, [#allocation2], [#allocation4]
    $region5: #{forward.1} parent=1 // pred_fallthru
      _
    // Predicated region
    $region6: #{forward.1} parent=1 // pred_check
      _
    $region7: #{forward.1} parent=1 // pred_check_branch
      %19 = sbr.rel (0) target = $region9
    $region8: #{forward.1} parent=1 // pred_region
      _
    $region9: #{forward.1} parent=1 // pred_fallthru
      _
    // Predicated region
    $region10: #{forward.1} parent=1 // pred_check
      _
    $region11: #{forward.1} parent=1 // pred_check_branch
      %21 = sbr.rel (0) target = $region13
    $region12: #{forward.1} parent=1 // pred_region
      %23 = dma.done [#allocation4], 16
    $region13: #{forward.1} parent=1 // pred_fallthru
      _
    %24 = sfence
    %v25 = vld [vmem:[%s1] sm:$0xff]
    %v26 = vld [vmem:[%s1 + $0x8] sm:$0xff]
    %v27 = vld [vmem:[%s1 + $0x10] sm:$0xff]
    %v28 = vld [vmem:[%s1 + $0x18] sm:$0xff]
    %v29 = vld [vmem:[%s1 + $0x20] sm:$0xff]
    %v30 = vld [vmem:[%s1 + $0x28] sm:$0xff]
    %v31 = vtanh.pop %v25
    %v32 = vtanh.pop %v26
    %v33 = vtanh.pop %v27
    %v34 = vtanh.pop %v28
    %v35 = vtanh.pop %v29
    %v36 = vtanh.pop %v30
    %v37 = vlaneseq
    %v38 = vshrl.u32 %v37, 7
    %v39 = vadd.s32 %v38, 8
    %v40 = vadd.s32 %v38, 16
    %v41 = vadd.s32 %v38, 24
    %v42 = vadd.s32 %v38, 32
    %v43 = vadd.s32 %v38, 40
    %v44 = vmul.u32 %v38, 128
    %v45 = vmul.u32 %v39, 128
    %v46 = vmul.u32 %v40, 128
    %v47 = vmul.u32 %v41, 128
    %v48 = vmul.u32 %v42, 128
    %v49 = vmul.u32 %v43, 128
    %v50 = vlaneseq
    %v51 = vand.u32 %v50, 127
    %v52 = vadd.s32 %v44, %v51
    %v53 = vadd.s32 %v45, %v51
    %v54 = vadd.s32 %v46, %v51
    %v55 = vadd.s32 %v47, %v51
    %v56 = vadd.s32 %v48, %v51
    %v57 = vadd.s32 %v49, %v51
    %vm58 = vcmp.lt.s32.totalorder %v52, 0
    %v59 = vsub.s32 0, %v52
    %v60 = vsel %vm58, %v59, %v52
    %v61 = vand.u32 %v60, 65535
    %v62 = vshrl.u32 %v60, 16
    %v64 = vmul.u32 %v61, 43691
    %v65 = vmul.u32 %v61, 43690
    %v66 = vmul.u32 %v62, 43691
    %v67 = vmul.u32 %v62, 43690
    %v68 = vshll.u32 %v65, 16
    %v69 = vshrl.u32 %v65, 16
    %v70 = vshll.u32 %v66, 16
    %v71 = vshrl.u32 %v66, 16
    %vm72 = vc.u32 %v64, %v68
    %v73 = vsel %vm72, 1, 0
    %v74 = vadd.s32 %v64, %v68
    %v75 = vadd.s32 %v67, %v73
    %vm76 = vc.u32 %v74, %v70
    %v77 = vsel %vm76, 1, 0
    %v78 = vadd.s32 %v74, %v70
    %v79 = vadd.s32 %v75, %v77
    %v80 = vadd.s32 %v79, %v69
    %v81 = vadd.s32 %v80, %v71
    %v82 = vshrl.u32 %v81, 1
    %v83 = vmul.u32 %v82, 3
    %v84 = vsub.s32 %v60, %v83
    %v85 = vsub.s32 0, %v84
    %v86 = vsel %vm58, %v85, %v84
    %vm87 = vcmp.lt.s32.totalorder %v53, 0
    %v88 = vsub.s32 0, %v53
    %v89 = vsel %vm87, %v88, %v53
    %v90 = vand.u32 %v89, 65535
    %v91 = vshrl.u32 %v89, 16
    %v93 = vmul.u32 %v90, 43691
    %v94 = vmul.u32 %v90, 43690
    %v95 = vmul.u32 %v91, 43691
    %v96 = vmul.u32 %v91, 43690
    %v97 = vshll.u32 %v94, 16
    %v98 = vshrl.u32 %v94, 16
    %v99 = vshll.u32 %v95, 16
    %v100 = vshrl.u32 %v95, 16
    %vm101 = vc.u32 %v93, %v97
    %v102 = vsel %vm101, 1, 0
    %v103 = vadd.s32 %v93, %v97
    %v104 = vadd.s32 %v96, %v102
    %vm105 = vc.u32 %v103, %v99
    %v106 = vsel %vm105, 1, 0
    %v107 = vadd.s32 %v103, %v99
    %v108 = vadd.s32 %v104, %v106
    %v109 = vadd.s32 %v108, %v98
    %v110 = vadd.s32 %v109, %v100
    %v111 = vshrl.u32 %v110, 1
    %v112 = vmul.u32 %v111, 3
    %v113 = vsub.s32 %v89, %v112
    %v114 = vsub.s32 0, %v113
    %v115 = vsel %vm87, %v114, %v113
    %vm116 = vcmp.lt.s32.totalorder %v54, 0
    %v117 = vsub.s32 0, %v54
    %v118 = vsel %vm116, %v117, %v54
    %v119 = vand.u32 %v118, 65535
    %v120 = vshrl.u32 %v118, 16
    %v122 = vmul.u32 %v119, 43691
    %v123 = vmul.u32 %v119, 43690
    %v124 = vmul.u32 %v120, 43691
    %v125 = vmul.u32 %v120, 43690
    %v126 = vshll.u32 %v123, 16
    %v127 = vshrl.u32 %v123, 16
    %v128 = vshll.u32 %v124, 16
    %v129 = vshrl.u32 %v124, 16
    %vm130 = vc.u32 %v122, %v126
    %v131 = vsel %vm130, 1, 0
    %v132 = vadd.s32 %v122, %v126
    %v133 = vadd.s32 %v125, %v131
    %vm134 = vc.u32 %v132, %v128
    %v135 = vsel %vm134, 1, 0
    %v136 = vadd.s32 %v132, %v128
    %v137 = vadd.s32 %v133, %v135
    %v138 = vadd.s32 %v137, %v127
    %v139 = vadd.s32 %v138, %v129
    %v140 = vshrl.u32 %v139, 1
    %v141 = vmul.u32 %v140, 3
    %v142 = vsub.s32 %v118, %v141
    %v143 = vsub.s32 0, %v142
    %v144 = vsel %vm116, %v143, %v142
    %vm145 = vcmp.lt.s32.totalorder %v55, 0
    %v146 = vsub.s32 0, %v55
    %v147 = vsel %vm145, %v146, %v55
    %v148 = vand.u32 %v147, 65535
    %v149 = vshrl.u32 %v147, 16
    %v151 = vmul.u32 %v148, 43691
    %v152 = vmul.u32 %v148, 43690
    %v153 = vmul.u32 %v149, 43691
    %v154 = vmul.u32 %v149, 43690
    %v155 = vshll.u32 %v152, 16
    %v156 = vshrl.u32 %v152, 16
    %v157 = vshll.u32 %v153, 16
    %v158 = vshrl.u32 %v153, 16
    %vm159 = vc.u32 %v151, %v155
    %v160 = vsel %vm159, 1, 0
    %v161 = vadd.s32 %v151, %v155
    %v162 = vadd.s32 %v154, %v160
    %vm163 = vc.u32 %v161, %v157
    %v164 = vsel %vm163, 1, 0
    %v165 = vadd.s32 %v161, %v157
    %v166 = vadd.s32 %v162, %v164
    %v167 = vadd.s32 %v166, %v156
    %v168 = vadd.s32 %v167, %v158
    %v169 = vshrl.u32 %v168, 1
    %v170 = vmul.u32 %v169, 3
    %v171 = vsub.s32 %v147, %v170
    %v172 = vsub.s32 0, %v171
    %v173 = vsel %vm145, %v172, %v171
    %vm174 = vcmp.lt.s32.totalorder %v56, 0
    %v175 = vsub.s32 0, %v56
    %v176 = vsel %vm174, %v175, %v56
    %v177 = vand.u32 %v176, 65535
    %v178 = vshrl.u32 %v176, 16
    %v180 = vmul.u32 %v177, 43691
    %v181 = vmul.u32 %v177, 43690
    %v182 = vmul.u32 %v178, 43691
    %v183 = vmul.u32 %v178, 43690
    %v184 = vshll.u32 %v181, 16
    %v185 = vshrl.u32 %v181, 16
    %v186 = vshll.u32 %v182, 16
    %v187 = vshrl.u32 %v182, 16
    %vm188 = vc.u32 %v180, %v184
    %v189 = vsel %vm188, 1, 0
    %v190 = vadd.s32 %v180, %v184
    %v191 = vadd.s32 %v183, %v189
    %vm192 = vc.u32 %v190, %v186
    %v193 = vsel %vm192, 1, 0
    %v194 = vadd.s32 %v190, %v186
    %v195 = vadd.s32 %v191, %v193
    %v196 = vadd.s32 %v195, %v185
    %v197 = vadd.s32 %v196, %v187
    %v198 = vshrl.u32 %v197, 1
    %v199 = vmul.u32 %v198, 3
    %v200 = vsub.s32 %v176, %v199
    %v201 = vsub.s32 0, %v200
    %v202 = vsel %vm174, %v201, %v200
    %vm203 = vcmp.lt.s32.totalorder %v57, 0
    %v204 = vsub.s32 0, %v57
    %v205 = vsel %vm203, %v204, %v57
    %v206 = vand.u32 %v205, 65535
    %v207 = vshrl.u32 %v205, 16
    %v209 = vmul.u32 %v206, 43691
    %v210 = vmul.u32 %v206, 43690
    %v211 = vmul.u32 %v207, 43691
    %v212 = vmul.u32 %v207, 43690
    %v213 = vshll.u32 %v210, 16
    %v214 = vshrl.u32 %v210, 16
    %v215 = vshll.u32 %v211, 16
    %v216 = vshrl.u32 %v211, 16
    %vm217 = vc.u32 %v209, %v213
    %v218 = vsel %vm217, 1, 0
    %v219 = vadd.s32 %v209, %v213
    %v220 = vadd.s32 %v212, %v218
    %vm221 = vc.u32 %v219, %v215
    %v222 = vsel %vm221, 1, 0
    %v223 = vadd.s32 %v219, %v215
    %v224 = vadd.s32 %v220, %v222
    %v225 = vadd.s32 %v224, %v214
    %v226 = vadd.s32 %v225, %v216
    %v227 = vshrl.u32 %v226, 1
    %v228 = vmul.u32 %v227, 3
    %v229 = vsub.s32 %v205, %v228
    %v230 = vsub.s32 0, %v229
    %v231 = vsel %vm203, %v230, %v229
    %vm232 = vcmp.ne.s32.totalorder %v86, 0
    %vm233 = vcmp.ne.s32.totalorder %v115, 0
    %vm234 = vcmp.ne.s32.totalorder %v144, 0
    %vm235 = vcmp.ne.s32.totalorder %v173, 0
    %vm236 = vcmp.ne.s32.totalorder %v202, 0
    %vm237 = vcmp.ne.s32.totalorder %v231, 0
    %vm238 = vcmp.lt.s32.totalorder %v86, 0
    %vm239 = vcmp.lt.s32.totalorder %v115, 0
    %vm240 = vcmp.lt.s32.totalorder %v144, 0
    %vm241 = vcmp.lt.s32.totalorder %v173, 0
    %vm242 = vcmp.lt.s32.totalorder %v202, 0
    %vm243 = vcmp.lt.s32.totalorder %v231, 0
    %vm244 = vmand %vm238, %vm232
    %vm245 = vmand %vm239, %vm233
    %vm246 = vmand %vm240, %vm234
    %vm247 = vmand %vm241, %vm235
    %vm248 = vmand %vm242, %vm236
    %vm249 = vmand %vm243, %vm237
    %v250 = vadd.s32 %v86, 3
    %v251 = vadd.s32 %v115, 3
    %v252 = vadd.s32 %v144, 3
    %v253 = vadd.s32 %v173, 3
    %v254 = vadd.s32 %v202, 3
    %v255 = vadd.s32 %v231, 3
    %v256 = vsel %vm244, %v250, %v86
    %v257 = vsel %vm245, %v251, %v115
    %v258 = vsel %vm246, %v252, %v144
    %v259 = vsel %vm247, %v253, %v173
    %v260 = vsel %vm248, %v254, %v202
    %v261 = vsel %vm249, %v255, %v231
    %vm262 = vcmp.eq.s32.totalorder %v256, 0
    %vm263 = vcmp.eq.s32.totalorder %v257, 0
    %vm264 = vcmp.eq.s32.totalorder %v258, 0
    %vm265 = vcmp.eq.s32.totalorder %v259, 0
    %vm266 = vcmp.eq.s32.totalorder %v260, 0
    %vm267 = vcmp.eq.s32.totalorder %v261, 0
    %v268 = vsel %vm262, %v31, 0.0
    %v269 = vsel %vm263, %v32, 0.0
    %v270 = vsel %vm264, %v33, 0.0
    %v271 = vsel %vm265, %v34, 0.0
    %v272 = vsel %vm266, %v35, 0.0
    %v273 = vsel %vm267, %v36, 0.0
    %v274 = vadd.f32 %v268, %v269
    %v275 = vadd.f32 %v274, %v270
    %v276 = vadd.f32 %v275, %v271
    %v277 = vadd.f32 %v276, %v272
    %v278 = vadd.f32 %v277, %v273
    %279 = vadd.xlane.f32.xlu0 %v278
    %v280 = vpop.xlane.xlu0 %279
    %v281 = vrot.slane %v280, 4
    %v282 = vadd.f32 %v280, %v281
    %v283 = vrot.slane %v282, 2
    %v284 = vadd.f32 %v282, %v283
    %v285 = vrot.slane %v284, 1
    %v286 = vadd.f32 %v284, %v285
    %s287 = vtos %v286
    %s288 = smul.f32 %s287, 0.0005787037
    %s289 = sld [smem:[#allocation2]]
    %s290 = sld [smem:[#allocation2 + $0x3]]
    %s291 = sld [smem:[#allocation2 + $0x6]]
    %s292 = sld [smem:[#allocation2 + $0x9]]
    %s293 = smul.f32 %s288, 256.0
    %s294 = smul.f32 %s293, %s288
    %s295 = sadd.f32 %s294, 0.0
    %s296 = smul.f32 %s288, 2.0
    %s297 = smul.f32 %s296, %s289
    %s298 = ssub.f32 %s295, %s297
    %s299 = sadd.f32 %s298, %s290
    %s300 = smul.f32 %s296, %s291
    %s301 = ssub.f32 %s295, %s300
    %s302 = sadd.f32 %s301, %s292
    %vm303 = vcmp.eq.s32.totalorder %v256, 1
    %vm304 = vcmp.eq.s32.totalorder %v257, 1
    %vm305 = vcmp.eq.s32.totalorder %v258, 1
    %vm306 = vcmp.eq.s32.totalorder %v259, 1
    %vm307 = vcmp.eq.s32.totalorder %v260, 1
    %vm308 = vcmp.eq.s32.totalorder %v261, 1
    %v309 = vsel %vm303, %v31, 0.0
    %v310 = vsel %vm304, %v32, 0.0
    %v311 = vsel %vm305, %v33, 0.0
    %v312 = vsel %vm306, %v34, 0.0
    %v313 = vsel %vm307, %v35, 0.0
    %v314 = vsel %vm308, %v36, 0.0
    %v315 = vadd.f32 %v309, %v310
    %v316 = vadd.f32 %v315, %v311
    %v317 = vadd.f32 %v316, %v312
    %v318 = vadd.f32 %v317, %v313
    %v319 = vadd.f32 %v318, %v314
    %320 = vadd.xlane.f32.xlu0 %v319
    %v321 = vpop.xlane.xlu0 %320
    %v322 = vrot.slane %v321, 4
    %v323 = vadd.f32 %v321, %v322
    %v324 = vrot.slane %v323, 2
    %v325 = vadd.f32 %v323, %v324
    %v326 = vrot.slane %v325, 1
    %v327 = vadd.f32 %v325, %v326
    %s328 = vtos %v327
    %s329 = smul.f32 %s328, 0.0005787037
    %s330 = sld [smem:[#allocation2 + $0x1]]
    %s331 = sld [smem:[#allocation2 + $0x4]]
    %s332 = sld [smem:[#allocation2 + $0x7]]
    %s333 = sld [smem:[#allocation2 + $0xa]]
    %s334 = smul.f32 %s329, 256.0
    %s335 = smul.f32 %s334, %s329
    %s336 = sadd.f32 %s299, %s335
    %s337 = smul.f32 %s329, 2.0
    %s338 = smul.f32 %s337, %s330
    %s339 = ssub.f32 %s336, %s338
    %s340 = sadd.f32 %s339, %s331
    %s341 = sadd.f32 %s302, %s335
    %s342 = smul.f32 %s337, %s332
    %s343 = ssub.f32 %s341, %s342
    %s344 = sadd.f32 %s343, %s333
    %vm345 = vcmp.eq.s32.totalorder %v256, 2
    %vm346 = vcmp.eq.s32.totalorder %v257, 2
    %vm347 = vcmp.eq.s32.totalorder %v258, 2
    %vm348 = vcmp.eq.s32.totalorder %v259, 2
    %vm349 = vcmp.eq.s32.totalorder %v260, 2
    %vm350 = vcmp.eq.s32.totalorder %v261, 2
    %v351 = vsel %vm345, %v31, 0.0
    %v352 = vsel %vm346, %v32, 0.0
    %v353 = vsel %vm347, %v33, 0.0
    %v354 = vsel %vm348, %v34, 0.0
    %v355 = vsel %vm349, %v35, 0.0
    %v356 = vsel %vm350, %v36, 0.0
    %v357 = vadd.f32 %v351, %v352
    %v358 = vadd.f32 %v357, %v353
    %v359 = vadd.f32 %v358, %v354
    %v360 = vadd.f32 %v359, %v355
    %v361 = vadd.f32 %v360, %v356
    %362 = vadd.xlane.f32.xlu0 %v361
    %v363 = vpop.xlane.xlu0 %362
    %v364 = vrot.slane %v363, 4
    %v365 = vadd.f32 %v363, %v364
    %v366 = vrot.slane %v365, 2
    %v367 = vadd.f32 %v365, %v366
    %v368 = vrot.slane %v367, 1
    %v369 = vadd.f32 %v367, %v368
    %s370 = vtos %v369
    %s371 = smul.f32 %s370, 0.0005787037
    %s372 = sld [smem:[#allocation2 + $0x2]]
    %s373 = sld [smem:[#allocation2 + $0x5]]
    %s374 = sld [smem:[#allocation2 + $0x8]]
    %s375 = sld [smem:[#allocation2 + $0xb]]
    %s376 = smul.f32 %s371, 256.0
    %s377 = smul.f32 %s376, %s371
    %s378 = sadd.f32 %s340, %s377
    %s379 = smul.f32 %s371, 2.0
    %s380 = smul.f32 %s379, %s372
    %s381 = ssub.f32 %s378, %s380
    %s382 = sadd.f32 %s381, %s373
    %s383 = sadd.f32 %s344, %s377
    %s384 = smul.f32 %s379, %s374
    %s385 = ssub.f32 %s383, %s384
    %s386 = sadd.f32 %s385, %s375
    %s387 = sadd.f32 %s382, %s386
    %s388 = smul.f32 %s387, 0.5
    %s389 = scalar_lea.smem [#allocation5], 0
    %390 = sst [smem:[%s389]] %s388
    // Predicated region
    $region14: #{forward.1} parent=1 // pred_check
      _
    $region15: #{forward.1} parent=1 // pred_check_branch
      %392 = sbr.rel (0) target = $region17
    $region16: #{forward.1} parent=1 // pred_region
      %394 = vsyncadd [#allocation3], 0
      %s396 = sshll.u32 %s2, 4
      %s397 = int_to_ptr.hbm [resolvable:$true] %s396
      %399 = dma.smem_to_hbm [#allocation5], 16, %s397, [#allocation3]
    $region17: #{forward.1} parent=1 // pred_fallthru
      _
    // Predicated region
    $region18: #{forward.1} parent=1 // pred_check
      _
    $region19: #{forward.1} parent=1 // pred_check_branch
      %401 = sbr.rel (0) target = $region21
    $region20: #{forward.1} parent=1 // pred_region
      %403 = dma.done [#allocation3], 16
    $region21: #{forward.1} parent=1 // pred_fallthru
      _
    %404 = sfence
    %405 = vsyncpa [#allocation3], 1
    %406 = vsyncpa [#allocation4], 1

</llo_original>
